<compile_context>
chip_gen: v5e
topology: v5e:2x2
jax: 0.10.0
libtpu: 0.0.40
codegen_flags: <defaults>
</compile_context>

<pallas_src>
import math

import jax
import jax.numpy as jnp
import numpy as np
from jax import lax
from jax.experimental import pallas as pl
from jax.experimental.pallas import tpu as pltpu

# ---- synthetic model dimensions (small, consistent with the forward pass) ----
B, C, IMG, PS = 2, 4, 16, 4        # batch, channels, image size, patch size
P = (IMG // PS) ** 2               # 16 patches per image
DP = C * PS * PS                   # 64 = flattened patch dim
HID = 32                           # hidden width
Q = 8                              # object queries
T = 8                              # text tokens
VOCAB = 64                         # synthetic text vocab
OUT_W = 128                        # lane-dense padded head / output width
OUT_ROWS = 8                       # sublane-dense output rows (full vreg)
BOX_LO, BOX_HI = T, T + 4          # lanes of the fused head holding the box
VAL_LANE = T + 4                   # packed-output lane holding the best logit


# ----------------------------- Pallas kernel ---------------------------------
def _dino_head_kernel(patch_ref, wpatch_ref, query_ref, whead_ref, bhead_ref,
                      out_ref):
    """One frame per grid step; weights stay VMEM-resident (const index_map)."""
    # Patch embedding (conv-as-matmul): (P, DP) @ (DP, HID) -> (P, HID).
    feat = jnp.dot(patch_ref[...], wpatch_ref[...],
                   preferred_element_type=jnp.float32)

    # Query -> image cross-attention scores, contracting HID directly
    # (no query broadcast, no batched dot_general): (Q, P).
    scores = lax.dot_general(query_ref[...], feat, (((1,), (1,)), ((), ())),
                             preferred_element_type=jnp.float32)
    scores = scores * (1.0 / math.sqrt(HID))
    m = jnp.max(scores, axis=-1, keepdims=True)
    e = jnp.exp(scores - m)
    attn = e / jnp.sum(e, axis=-1, keepdims=True)            # exact division

    # Attention output: (Q, P) @ (P, HID) -> (Q, HID).
    att = jnp.dot(attn, feat, preferred_element_type=jnp.float32)

    # Fused, lane-padded head [text logits | box | zeros]: (Q, 128) one vreg.
    head = jnp.dot(att, whead_ref[...],
                   preferred_element_type=jnp.float32) + bhead_ref[...]

    lane = lax.broadcasted_iota(jnp.int32, (Q, OUT_W), 1)
    text_mask = lane < T
    box_mask = jnp.logical_and(lane >= BOX_LO, lane < BOX_HI)

    # logits, _ = pred_logits.max(2): masked max over the text lanes.
    max_class = jnp.max(jnp.where(text_mask, head, -jnp.inf),
                        axis=1, keepdims=True)                # (Q, 1)
    # logits, ind = logits.max(1): best query (first index on ties, as torch).
    best_val = jnp.max(max_class, axis=0, keepdims=True)      # (1, 1)
    qiota = lax.broadcasted_iota(jnp.int32, (Q, 1), 0)
    # NOTE: exact float equality is safe only because best_val is the max of
    # this very max_class array (same dtype, same values).  Do not recompute
    # best_val in a different precision.
    best_idx = jnp.min(jnp.where(max_class == best_val, qiota, Q),
                       axis=0, keepdims=True)                 # (1, 1)
    sel = (qiota == best_idx).astype(jnp.float32)             # (Q, 1) one-hot

    # gather(pred_boxes, ind): exact sigmoid, masked to the box lanes,
    # one-hot select over queries (stays in the VPU slot, no lane shifts).
    pred_boxes = jnp.where(box_mask, 1.0 / (1.0 + jnp.exp(-head)), 0.0)
    boxes_row = jnp.sum(pred_boxes * sel, axis=0, keepdims=True)   # (1, 128)

    # Pack [.. boxes at lanes 8..11 | best logit at lane 12 ..] into a full
    # (8, 128) vreg and write it with a single unmasked store.
    out_lane = lax.broadcasted_iota(jnp.int32, (OUT_ROWS, OUT_W), 1)
    out_ref[...] = jnp.where(out_lane == VAL_LANE, best_val,
                             jnp.broadcast_to(boxes_row, (OUT_ROWS, OUT_W)))


# ------------------------------- wrappers -------------------------------------
def build_fused_head(text_feats, w_box, b_box):
    """Once per caption: fuse text-similarity + box heads, padded to 128 lanes."""
    w_head = jnp.zeros((HID, OUT_W), jnp.float32)
    w_head = w_head.at[:, :T].set(text_feats.T)
    w_head = w_head.at[:, BOX_LO:BOX_HI].set(w_box)
    b_head = jnp.zeros((1, OUT_W), jnp.float32)
    b_head = b_head.at[:, BOX_LO:BOX_HI].set(b_box)
    return w_head, b_head


@jax.jit
def grounding_dino_head(patches, w_patch, queries, w_head, b_head):
    batch = patches.shape[0]
    flops = 2 * batch * (P * DP * HID + Q * HID * P + Q * P * HID
                         + Q * HID * OUT_W)
    transcendentals = batch * (Q * P + Q * OUT_W)
    bytes_accessed = 4 * (batch * P * DP + DP * HID + Q * HID + HID * OUT_W
                          + OUT_W + batch * OUT_ROWS * OUT_W)

    packed = pl.pallas_call(
        _dino_head_kernel,
        out_shape=jax.ShapeDtypeStruct((batch, OUT_ROWS, OUT_W), jnp.float32),
        grid=(batch,),
        in_specs=[
            pl.BlockSpec((None, P, DP), lambda b: (b, 0, 0)),   # per-frame patches
            pl.BlockSpec((DP, HID), lambda b: (0, 0)),          # resident weights
            pl.BlockSpec((Q, HID), lambda b: (0, 0)),
            pl.BlockSpec((HID, OUT_W), lambda b: (0, 0)),
            pl.BlockSpec((1, OUT_W), lambda b: (0, 0)),
        ],
        out_specs=pl.BlockSpec((None, OUT_ROWS, OUT_W), lambda b: (b, 0, 0)),
        compiler_params=pltpu.CompilerParams(
            dimension_semantics=("parallel",)),
        cost_estimate=pl.CostEstimate(flops=flops,
                                      transcendentals=transcendentals,
                                      bytes_accessed=bytes_accessed),
    )(patches, w_patch, queries, w_head, b_head)

    boxes = packed[:, 0, BOX_LO:BOX_HI]                # (B, 4)
    logits = packed[:, 0, VAL_LANE:VAL_LANE + 1]       # (B, 1)
    return boxes, logits


# ------------------------------- glue (JAX) -----------------------------------
def image_to_patches(x):
    """NCHW image -> (B, P, C*PS*PS) non-overlapping patch rows."""
    b, c, h, w = x.shape
    x = x.reshape(b, c, h // PS, PS, w // PS, PS)
    x = x.transpose(0, 2, 4, 1, 3, 5)
    return x.reshape(b, (h // PS) * (w // PS), c * PS * PS)


def tokenize_caption(caption, t, vocab):
    """Deterministic synthetic tokenizer mimicking preprocess_caption."""
    cap = caption.lower().strip()
    if not cap.endswith('.'):
        cap = cap + ' .'
    words = cap.split()
    ids = [sum(ord(ch) for ch in w) % vocab for w in words]
    ids = (ids + [0] * t)[:t]
    return jnp.array(ids, dtype=jnp.int32)


def reference(patches, w_patch, queries, text_feats, w_box, b_box):
    """Pure-JAX reference (unfused, exact math) for correctness checking."""
    hp = lax.Precision.HIGHEST
    feat = jnp.einsum('bpd,dh->bph', patches, w_patch, precision=hp)
    scores = jnp.einsum('qh,bph->bqp', queries, feat,
                        precision=hp) / math.sqrt(HID)
    attn = jax.nn.softmax(scores, axis=-1)
    att = jnp.einsum('bqp,bph->bqh', attn, feat, precision=hp)
    pred_logits = jnp.einsum('bqh,th->bqt', att, text_feats, precision=hp)
    pred_boxes = jax.nn.sigmoid(
        jnp.einsum('bqh,hf->bqf', att, w_box, precision=hp) + b_box[0])
    max_class = pred_logits.max(2)                      # (B, Q)
    best_val = max_class.max(1)[:, None]                # (B, 1)
    ind = jnp.argmax(max_class, axis=1)
    boxes = pred_boxes[jnp.arange(pred_boxes.shape[0]), ind]   # (B, 4)
    return boxes, best_val


# --------------------------------- main ---------------------------------------
if __name__ == "__main__":
    key = jax.random.PRNGKey(0)
    k_img, k_wp, k_q, k_t, k_wb, k_bb = jax.random.split(key, 6)

    image = jax.random.normal(k_img, (B, C, IMG, IMG), jnp.float32)  # NCHW obs
    w_patch = 0.1 * jax.random.normal(k_wp, (DP, HID), jnp.float32)
    queries = 0.1 * jax.random.normal(k_q, (Q, HID), jnp.float32)
    emb_table = 0.1 * jax.random.normal(k_t, (VOCAB, HID), jnp.float32)
    w_box = 0.1 * jax.random.normal(k_wb, (HID, 4), jnp.float32)
    b_box = 0.1 * jax.random.normal(k_bb, (1, 4), jnp.float32)

    token_ids = tokenize_caption('little robot dog', T, VOCAB)
    text_feats = emb_table[token_ids]                                # (T, HID)

    # Hoisted per-caption work: fused, lane-padded head weights.
    w_head, b_head = build_fused_head(text_feats, w_box, b_box)

    patches = image_to_patches(image)                                # (B, P, DP)

    boxes, logits = grounding_dino_head(patches, w_patch, queries, w_head,
                                        b_head)
    boxes, logits = jax.block_until_ready((boxes, logits))

    ref_boxes, ref_logits = reference(patches, w_patch, queries, text_feats,
                                      w_box, b_box)
    np.testing.assert_allclose(np.asarray(boxes), np.asarray(ref_boxes),
                               rtol=1e-4, atol=1e-4)
    np.testing.assert_allclose(np.asarray(logits), np.asarray(ref_logits),
                               rtol=1e-4, atol=1e-4)
    assert boxes.shape == (B, 4) and logits.shape == (B, 1)

    print("KERNEL_OK")
</pallas_src>

<mosaic_0001>
module attributes {stable_mosaic.version = 11 : i64} {
  func.func @_dino_head_kernel(%arg0: i32, %arg1: memref<1x16x64xf32, #tpu.memory_space<vmem>>, %arg2: memref<64x32xf32, #tpu.memory_space<vmem>>, %arg3: memref<8x32xf32, #tpu.memory_space<vmem>>, %arg4: memref<32x128xf32, #tpu.memory_space<vmem>>, %arg5: memref<1x128xf32, #tpu.memory_space<vmem>>, %arg6: memref<1x8x128xf32, #tpu.memory_space<vmem>>) attributes {dimension_semantics = [#tpu.dimension_semantics<parallel>], iteration_bounds = array<i64: 2>, scalar_prefetch = 0 : i64, scratch_operands = 0 : i64, tpu.core_type = #tpu.core_type<tc>, window_params = [{transform_indices = @transform_0, window_bounds = array<i64: 1, 16, 64>}, {pipeline_mode = #tpu.pipeline_mode<synchronous>, transform_indices = @transform_1, window_bounds = array<i64: 64, 32>}, {pipeline_mode = #tpu.pipeline_mode<synchronous>, transform_indices = @transform_2, window_bounds = array<i64: 8, 32>}, {pipeline_mode = #tpu.pipeline_mode<synchronous>, transform_indices = @transform_3, window_bounds = array<i64: 32, 128>}, {pipeline_mode = #tpu.pipeline_mode<synchronous>, transform_indices = @transform_4, window_bounds = array<i64: 1, 128>}, {transform_indices = @transform_5, window_bounds = array<i64: 1, 8, 128>}]} {
    %c0 = arith.constant 0 : index
    %c0_0 = arith.constant 0 : index
    %c0_1 = arith.constant 0 : index
    %0 = vector.load %arg1[%c0, %c0_0, %c0_1] : memref<1x16x64xf32, #tpu.memory_space<vmem>>, vector<1x16x64xf32>
    %1 = vector.shape_cast %0 : vector<1x16x64xf32> to vector<16x64xf32>
    %c0_2 = arith.constant 0 : index
    %c0_3 = arith.constant 0 : index
    %2 = vector.load %arg2[%c0_2, %c0_3] : memref<64x32xf32, #tpu.memory_space<vmem>>, vector<64x32xf32>
    %cst = arith.constant dense<0.000000e+00> : vector<16x32xf32>
    %3 = tpu.matmul %1, %2, %cst {dimension_numbers = #tpu.dot_dimension_numbers<[1], [0], [0], [1], [0, 0, 1, 1], [], []>} : vector<16x64xf32>, vector<64x32xf32>, vector<16x32xf32> -> vector<16x32xf32>
    %c0_4 = arith.constant 0 : index
    %c0_5 = arith.constant 0 : index
    %4 = vector.load %arg3[%c0_4, %c0_5] : memref<8x32xf32, #tpu.memory_space<vmem>>, vector<8x32xf32>
    %cst_6 = arith.constant dense<0.000000e+00> : vector<8x16xf32>
    %5 = tpu.matmul %4, %3, %cst_6 {dimension_numbers = #tpu.dot_dimension_numbers<[1], [1], [0], [0], [0, 0, 1, 0], [], []>} : vector<8x32xf32>, vector<16x32xf32>, vector<8x16xf32> -> vector<8x16xf32>
    %cst_7 = arith.constant 0.176776692 : f32
    %6 = vector.broadcast %cst_7 : f32 to vector<8x16xf32>
    %7 = arith.mulf %5, %6 : vector<8x16xf32>
    %cst_8 = arith.constant dense<0xFF800000> : vector<8xf32>
    %8 = vector.multi_reduction <maximumf>, %7, %cst_8 [1] : vector<8x16xf32> to vector<8xf32>
    %9 = vector.shape_cast %8 : vector<8xf32> to vector<8x1xf32>
    %10 = vector.broadcast %9 : vector<8x1xf32> to vector<8x16xf32>
    %11 = arith.subf %7, %10 : vector<8x16xf32>
    %12 = math.exp %11 : vector<8x16xf32>
    %cst_9 = arith.constant dense<0.000000e+00> : vector<8xf32>
    %13 = vector.multi_reduction <add>, %12, %cst_9 [1] : vector<8x16xf32> to vector<8xf32>
    %14 = vector.shape_cast %13 : vector<8xf32> to vector<8x1xf32>
    %15 = vector.broadcast %14 : vector<8x1xf32> to vector<8x16xf32>
    %16 = arith.divf %12, %15 : vector<8x16xf32>
    %cst_10 = arith.constant dense<0.000000e+00> : vector<8x32xf32>
    %17 = tpu.matmul %16, %3, %cst_10 {dimension_numbers = #tpu.dot_dimension_numbers<[1], [0], [0], [1], [0, 0, 1, 1], [], []>} : vector<8x16xf32>, vector<16x32xf32>, vector<8x32xf32> -> vector<8x32xf32>
    %c0_11 = arith.constant 0 : index
    %c0_12 = arith.constant 0 : index
    %18 = vector.load %arg4[%c0_11, %c0_12] : memref<32x128xf32, #tpu.memory_space<vmem>>, vector<32x128xf32>
    %cst_13 = arith.constant dense<0.000000e+00> : vector<8x128xf32>
    %19 = tpu.matmul %17, %18, %cst_13 {dimension_numbers = #tpu.dot_dimension_numbers<[1], [0], [0], [1], [0, 0, 1, 1], [], []>} : vector<8x32xf32>, vector<32x128xf32>, vector<8x128xf32> -> vector<8x128xf32>
    %c0_14 = arith.constant 0 : index
    %c0_15 = arith.constant 0 : index
    %20 = vector.load %arg5[%c0_14, %c0_15] : memref<1x128xf32, #tpu.memory_space<vmem>>, vector<1x128xf32>
    %21 = vector.broadcast %20 : vector<1x128xf32> to vector<8x128xf32>
    %22 = arith.addf %19, %21 : vector<8x128xf32>
    %23 = tpu.iota {dimensions = array<i32: 1>} : vector<8x128xi32>
    %c8_i32 = arith.constant 8 : i32
    %24 = vector.broadcast %c8_i32 : i32 to vector<8x128xi32>
    %25 = arith.cmpi slt, %23, %24 : vector<8x128xi32>
    %c8_i32_16 = arith.constant 8 : i32
    %26 = vector.broadcast %c8_i32_16 : i32 to vector<8x128xi32>
    %27 = arith.cmpi sge, %23, %26 : vector<8x128xi32>
    %c12_i32 = arith.constant 12 : i32
    %28 = vector.broadcast %c12_i32 : i32 to vector<8x128xi32>
    %29 = arith.cmpi slt, %23, %28 : vector<8x128xi32>
    %30 = arith.andi %27, %29 : vector<8x128xi1>
    %cst_17 = arith.constant 0xFF800000 : f32
    %31 = vector.broadcast %cst_17 : f32 to vector<8x128xf32>
    %32 = arith.select %25, %22, %31 : vector<8x128xi1>, vector<8x128xf32>
    %cst_18 = arith.constant dense<0xFF800000> : vector<8xf32>
    %33 = vector.multi_reduction <maximumf>, %32, %cst_18 [1] : vector<8x128xf32> to vector<8xf32>
    %34 = vector.shape_cast %33 : vector<8xf32> to vector<8x1xf32>
    %cst_19 = arith.constant dense<0xFF800000> : vector<1xf32>
    %35 = vector.multi_reduction <maximumf>, %34, %cst_19 [0] : vector<8x1xf32> to vector<1xf32>
    %36 = vector.shape_cast %35 : vector<1xf32> to vector<1x1xf32>
    %37 = tpu.iota {dimensions = array<i32: 0>} : vector<8x1xi32>
    %38 = vector.broadcast %36 : vector<1x1xf32> to vector<8x1xf32>
    %39 = arith.cmpf oeq, %34, %38 : vector<8x1xf32>
    %c8_i32_20 = arith.constant 8 : i32
    %40 = vector.broadcast %c8_i32_20 : i32 to vector<8x1xi32>
    %41 = arith.select %39, %37, %40 : vector<8x1xi1>, vector<8x1xi32>
    %cst_21 = arith.constant dense<2147483647> : vector<1xi32>
    %42 = vector.multi_reduction <minsi>, %41, %cst_21 [0] : vector<8x1xi32> to vector<1xi32>
    %43 = vector.shape_cast %42 : vector<1xi32> to vector<1x1xi32>
    %44 = vector.broadcast %43 : vector<1x1xi32> to vector<8x1xi32>
    %45 = arith.cmpi eq, %37, %44 : vector<8x1xi32>
    %46 = arith.extui %45 : vector<8x1xi1> to vector<8x1xi32>
    %47 = arith.sitofp %46 : vector<8x1xi32> to vector<8x1xf32>
    %cst_22 = arith.constant 0.000000e+00 : f32
    %48 = vector.broadcast %cst_22 : f32 to vector<8x128xf32>
    %49 = arith.subf %48, %22 : vector<8x128xf32>
    %50 = math.exp %49 : vector<8x128xf32>
    %cst_23 = arith.constant 1.000000e+00 : f32
    %51 = vector.broadcast %cst_23 : f32 to vector<8x128xf32>
    %52 = arith.addf %51, %50 : vector<8x128xf32>
    %cst_24 = arith.constant 1.000000e+00 : f32
    %53 = vector.broadcast %cst_24 : f32 to vector<8x128xf32>
    %54 = arith.divf %53, %52 : vector<8x128xf32>
    %cst_25 = arith.constant 0.000000e+00 : f32
    %55 = vector.broadcast %cst_25 : f32 to vector<8x128xf32>
    %56 = arith.select %30, %54, %55 : vector<8x128xi1>, vector<8x128xf32>
    %57 = vector.broadcast %47 : vector<8x1xf32> to vector<8x128xf32>
    %58 = arith.mulf %56, %57 : vector<8x128xf32>
    %cst_26 = arith.constant dense<0.000000e+00> : vector<128xf32>
    %59 = vector.multi_reduction <add>, %58, %cst_26 [0] : vector<8x128xf32> to vector<128xf32>
    %60 = vector.shape_cast %59 : vector<128xf32> to vector<1x128xf32>
    %61 = tpu.iota {dimensions = array<i32: 1>} : vector<8x128xi32>
    %c12_i32_27 = arith.constant 12 : i32
    %62 = vector.broadcast %c12_i32_27 : i32 to vector<8x128xi32>
    %63 = arith.cmpi eq, %61, %62 : vector<8x128xi32>
    %64 = vector.shape_cast %60 : vector<1x128xf32> to vector<1x128xf32>
    %65 = vector.broadcast %64 : vector<1x128xf32> to vector<8x128xf32>
    %66 = vector.shape_cast %36 : vector<1x1xf32> to vector<1x1xf32>
    %67 = vector.broadcast %66 : vector<1x1xf32> to vector<8x128xf32>
    %68 = arith.select %63, %67, %65 : vector<8x128xi1>, vector<8x128xf32>
    %c0_28 = arith.constant 0 : index
    %c0_29 = arith.constant 0 : index
    %c0_30 = arith.constant 0 : index
    %69 = vector.load %arg6[%c0_28, %c0_29, %c0_30] : memref<1x8x128xf32, #tpu.memory_space<vmem>>, vector<1x8x128xf32>
    %70 = vector.shape_cast %69 : vector<1x8x128xf32> to vector<8x128xf32>
    %71 = vector.shape_cast %68 : vector<8x128xf32> to vector<1x8x128xf32>
    tpu.vector_store %arg6[%c0_28, %c0_29, %c0_30], %71 {strides = array<i32>} : memref<1x8x128xf32, #tpu.memory_space<vmem>>, vector<1x8x128xf32>,
    return
  }
  func.func @transform_0(%arg0: i32) -> (i32, i32, i32) {
    %c0_i32 = arith.constant 0 : i32
    %c0_i32_0 = arith.constant 0 : i32
    %c0_i32_1 = arith.constant 0 : i32
    return %arg0, %c0_i32, %c0_i32_0 : i32, i32, i32
  }
  func.func @transform_1(%arg0: i32) -> (i32, i32) {
    %c0_i32 = arith.constant 0 : i32
    %c0_i32_0 = arith.constant 0 : i32
    %c0_i32_1 = arith.constant 0 : i32
    return %c0_i32, %c0_i32_0 : i32, i32
  }
  func.func @transform_2(%arg0: i32) -> (i32, i32) {
    %c0_i32 = arith.constant 0 : i32
    %c0_i32_0 = arith.constant 0 : i32
    %c0_i32_1 = arith.constant 0 : i32
    return %c0_i32, %c0_i32_0 : i32, i32
  }
  func.func @transform_3(%arg0: i32) -> (i32, i32) {
    %c0_i32 = arith.constant 0 : i32
    %c0_i32_0 = arith.constant 0 : i32
    %c0_i32_1 = arith.constant 0 : i32
    return %c0_i32, %c0_i32_0 : i32, i32
  }
  func.func @transform_4(%arg0: i32) -> (i32, i32) {
    %c0_i32 = arith.constant 0 : i32
    %c0_i32_0 = arith.constant 0 : i32
    %c0_i32_1 = arith.constant 0 : i32
    return %c0_i32, %c0_i32_0 : i32, i32
  }
  func.func @transform_5(%arg0: i32) -> (i32, i32, i32) {
    %c0_i32 = arith.constant 0 : i32
    %c0_i32_0 = arith.constant 0 : i32
    %c0_i32_1 = arith.constant 0 : i32
    return %arg0, %c0_i32, %c0_i32_0 : i32, i32, i32
  }
}

</mosaic_0001>

<llo_original>
// kernel: grounding_dino_head.1
$region0: #{grounding_dino_head.1}
  #allocation0 [shape = 'u32[]', space=smem, size = 0x4, offset = 0x4, fixed_abs, tag = 'smem constant byte address 0x4 - core index']
  #allocation1 [shape = 'u32[72,128]{1,0:T(1,128)}', space=vmem, size = 0x9000, scoped, tag = 'internal scratch']
  %s0 = inlined_call_operand.vmem [shape: f32[2,16,64], index: 0, kind: input, shape index: {}]
  %s1 = inlined_call_operand.vmem [shape: f32[64,32], index: 1, kind: input, shape index: {}]
  %s2 = inlined_call_operand.vmem [shape: f32[8,32], index: 2, kind: input, shape index: {}]
  %s3 = inlined_call_operand.vmem [shape: f32[32,128], index: 3, kind: input, shape index: {}]
  %s4 = inlined_call_operand.vmem [shape: f32[1,128], index: 4, kind: input, shape index: {}]
  %s5 = inlined_call_operand.vmem [shape: f32[2,8,128], index: 5, kind: output, shape index: {}]
  %s6 = sld [smem:[#allocation0]]
  $region53: #{grounding_dino_head.1} parent=0
    _
  %s8 = ssub.s32 1, %s6
  %s9 = scalar_select 0, %s8, %s6
  loop: start=0, step=1, limit=4
  $region2: #{grounding_dino_head.1} parent=0 // loop_pre_header
    _
  $region3: #{grounding_dino_head.1} parent=0 // loop_header
    %s11 = sphi 0, %s15
    %p12 = scmp.ge.s32.totalorder %s11, 4
    %s21 = sphi 0, %s23
    %s24 = sphi 0, %s21
    %s25 = sphi 0, %s24
    %s41 = sphi 0, %s25
    %s45 = sphi 0, %s45
    %s47 = sphi 0, %s45
    %s48 = sphi 0, %s47
    %s62 = sphi 0, %s48
    %s66 = sphi 0, %s66
    %s68 = sphi 0, %s66
    %s69 = sphi 0, %s68
    %s83 = sphi 0, %s69
    %s87 = sphi 0, %s87
    %s89 = sphi 0, %s87
    %s90 = sphi 0, %s89
    %s104 = sphi 0, %s90
    %s108 = sphi 0, %s108
    %s110 = sphi 0, %s108
    %s111 = sphi 0, %s110
    %s125 = sphi 0, %s111
    %s131 = sphi 0, %s133
    %s134 = sphi 0, %s131
    %s135 = sphi 0, %s134
    %s151 = sphi 0, %s135
  $region4: #{grounding_dino_head.1} parent=0 // loop_header_branch
    %14 = sbr.rel (%p12) target = $region8
  $region5: #{grounding_dino_head.1} parent=0 // loop_body
    %s16 = ssub.s32 %s11, 1
    %s17 = ssub.s32 %s11, 2
    %s18 = sadd.s32 %s11, 1
    %s19 = ssub.s32 %s11, %s18
    %p20 = scmp.eq.s32.totalorder %s19, 0
    %s22 = sadd.s32 %s21, 1
    %s23 = scalar_select %p20, %s21, %s22
    %p26 = pneg %p20
    %p27 = scmp.eq.s32.totalorder %s11, 1
    %p28 = por %p26, %p27
    %p29 = scmp.ne.s32.totalorder %s21, %s24
    %p30 = scmp.eq.s32.totalorder %s11, 0
    %p31 = por %p29, %p30
    %p32 = scmp.ne.s32.totalorder %s21, %s24
    %p33 = scmp.eq.s32.totalorder %s16, 1
    %p34 = por %p32, %p33
    %p35 = scmp.ne.s32.totalorder %s24, %s25
    %p36 = scmp.eq.s32.totalorder %s16, 0
    %p37 = por %p35, %p36
    %p38 = scmp.ne.s32.totalorder %s24, %s25
    %p39 = scmp.eq.s32.totalorder %s17, 1
    %p40 = por %p38, %p39
    %p42 = scmp.ne.s32.totalorder %s25, %s41
    %p43 = scmp.eq.s32.totalorder %s17, 0
    %p44 = por %p42, %p43
    %s46 = sadd.s32 %s45, 1
    %p49 = scmp.eq.s32.totalorder %s11, 1
    %p50 = scmp.ne.s32.totalorder %s45, %s47
    %p51 = scmp.eq.s32.totalorder %s11, 0
    %p52 = por %p50, %p51
    %p53 = scmp.ne.s32.totalorder %s45, %s47
    %p54 = scmp.eq.s32.totalorder %s16, 1
    %p55 = por %p53, %p54
    %p56 = scmp.ne.s32.totalorder %s47, %s48
    %p57 = scmp.eq.s32.totalorder %s16, 0
    %p58 = por %p56, %p57
    %p59 = scmp.ne.s32.totalorder %s47, %s48
    %p60 = scmp.eq.s32.totalorder %s17, 1
    %p61 = por %p59, %p60
    %p63 = scmp.ne.s32.totalorder %s48, %s62
    %p64 = scmp.eq.s32.totalorder %s17, 0
    %p65 = por %p63, %p64
    %s67 = sadd.s32 %s66, 1
    %p70 = scmp.eq.s32.totalorder %s11, 1
    %p71 = scmp.ne.s32.totalorder %s66, %s68
    %p72 = scmp.eq.s32.totalorder %s11, 0
    %p73 = por %p71, %p72
    %p74 = scmp.ne.s32.totalorder %s66, %s68
    %p75 = scmp.eq.s32.totalorder %s16, 1
    %p76 = por %p74, %p75
    %p77 = scmp.ne.s32.totalorder %s68, %s69
    %p78 = scmp.eq.s32.totalorder %s16, 0
    %p79 = por %p77, %p78
    %p80 = scmp.ne.s32.totalorder %s68, %s69
    %p81 = scmp.eq.s32.totalorder %s17, 1
    %p82 = por %p80, %p81
    %p84 = scmp.ne.s32.totalorder %s69, %s83
    %p85 = scmp.eq.s32.totalorder %s17, 0
    %p86 = por %p84, %p85
    %s88 = sadd.s32 %s87, 1
    %p91 = scmp.eq.s32.totalorder %s11, 1
    %p92 = scmp.ne.s32.totalorder %s87, %s89
    %p93 = scmp.eq.s32.totalorder %s11, 0
    %p94 = por %p92, %p93
    %p95 = scmp.ne.s32.totalorder %s87, %s89
    %p96 = scmp.eq.s32.totalorder %s16, 1
    %p97 = por %p95, %p96
    %p98 = scmp.ne.s32.totalorder %s89, %s90
    %p99 = scmp.eq.s32.totalorder %s16, 0
    %p100 = por %p98, %p99
    %p101 = scmp.ne.s32.totalorder %s89, %s90
    %p102 = scmp.eq.s32.totalorder %s17, 1
    %p103 = por %p101, %p102
    %p105 = scmp.ne.s32.totalorder %s90, %s104
    %p106 = scmp.eq.s32.totalorder %s17, 0
    %p107 = por %p105, %p106
    %s109 = sadd.s32 %s108, 1
    %p112 = scmp.eq.s32.totalorder %s11, 1
    %p113 = scmp.ne.s32.totalorder %s108, %s110
    %p114 = scmp.eq.s32.totalorder %s11, 0
    %p115 = por %p113, %p114
    %p116 = scmp.ne.s32.totalorder %s108, %s110
    %p117 = scmp.eq.s32.totalorder %s16, 1
    %p118 = por %p116, %p117
    %p119 = scmp.ne.s32.totalorder %s110, %s111
    %p120 = scmp.eq.s32.totalorder %s16, 0
    %p121 = por %p119, %p120
    %p122 = scmp.ne.s32.totalorder %s110, %s111
    %p123 = scmp.eq.s32.totalorder %s17, 1
    %p124 = por %p122, %p123
    %p126 = scmp.ne.s32.totalorder %s111, %s125
    %p127 = scmp.eq.s32.totalorder %s17, 0
    %p128 = por %p126, %p127
    %s129 = ssub.s32 %s11, %s18
    %p130 = scmp.eq.s32.totalorder %s129, 0
    %s132 = sadd.s32 %s131, 1
    %s133 = scalar_select %p130, %s131, %s132
    %p136 = pneg %p130
    %p137 = scmp.eq.s32.totalorder %s11, 1
    %p138 = por %p136, %p137
    %p139 = scmp.ne.s32.totalorder %s131, %s134
    %p140 = scmp.eq.s32.totalorder %s11, 0
    %p141 = por %p139, %p140
    %p142 = scmp.ne.s32.totalorder %s131, %s134
    %p143 = scmp.eq.s32.totalorder %s16, 1
    %p144 = por %p142, %p143
    %p145 = scmp.ne.s32.totalorder %s134, %s135
    %p146 = scmp.eq.s32.totalorder %s16, 0
    %p147 = por %p145, %p146
    %p148 = scmp.ne.s32.totalorder %s134, %s135
    %p149 = scmp.eq.s32.totalorder %s17, 1
    %p150 = por %p148, %p149
    %p152 = scmp.ne.s32.totalorder %s135, %s151
    %p153 = scmp.eq.s32.totalorder %s17, 0
    %p154 = por %p152, %p153
    %p155 = scmp.le.s32.totalorder 1, %s11
    %p156 = scmp.lt.s32.totalorder %s11, 3
    %p157 = pnand %p155, %p156
    %p158 = pneg %p157
    // Predicated region
    $region9: #{grounding_dino_head.1} parent=5 // pred_check
      _
    $region10: #{grounding_dino_head.1} parent=5 // pred_check_branch
      %160 = sbr.rel (%p157) target = $region12
    $region11: #{grounding_dino_head.1} parent=5 // pred_region
      %s161 = ssub.s32 %s11, 1
      // Predicated region
      $region13: #{grounding_dino_head.1} parent=11 // pred_check
        %p162 = pneg %p58
      $region14: #{grounding_dino_head.1} parent=11 // pred_check_branch
        %164 = sbr.rel (%p162) target = $region16
      $region15: #{grounding_dino_head.1} parent=11 // pred_region
        _
      $region16: #{grounding_dino_head.1} parent=11 // pred_fallthru
        _
      // Predicated region
      $region17: #{grounding_dino_head.1} parent=11 // pred_check
        %p165 = pneg %p79
      $region18: #{grounding_dino_head.1} parent=11 // pred_check_branch
        %167 = sbr.rel (%p165) target = $region20
      $region19: #{grounding_dino_head.1} parent=11 // pred_region
        _
      $region20: #{grounding_dino_head.1} parent=11 // pred_fallthru
        _
      // Predicated region
      $region21: #{grounding_dino_head.1} parent=11 // pred_check
        %p168 = pneg %p100
      $region22: #{grounding_dino_head.1} parent=11 // pred_check_branch
        %170 = sbr.rel (%p168) target = $region24
      $region23: #{grounding_dino_head.1} parent=11 // pred_region
        _
      $region24: #{grounding_dino_head.1} parent=11 // pred_fallthru
        _
      // Predicated region
      $region25: #{grounding_dino_head.1} parent=11 // pred_check
        %p171 = pneg %p121
      $region26: #{grounding_dino_head.1} parent=11 // pred_check_branch
        %173 = sbr.rel (%p171) target = $region28
      $region27: #{grounding_dino_head.1} parent=11 // pred_region
        _
      $region28: #{grounding_dino_head.1} parent=11 // pred_fallthru
        _
    $region12: #{grounding_dino_head.1} parent=5 // pred_fallthru
      _
    %p174 = scmp.lt.s32.totalorder %s11, 2
    // Predicated region
    $region29: #{grounding_dino_head.1} parent=5 // pred_check
      %p175 = pneg %p174
    $region30: #{grounding_dino_head.1} parent=5 // pred_check_branch
      %177 = sbr.rel (%p175) target = $region32
    $region31: #{grounding_dino_head.1} parent=5 // pred_region
      // Predicated region
      $region33: #{grounding_dino_head.1} parent=31 // pred_check
        %p178 = pneg %p31
      $region34: #{grounding_dino_head.1} parent=31 // pred_check_branch
        %180 = sbr.rel (%p178) target = $region36
      $region35: #{grounding_dino_head.1} parent=31 // pred_region
        %p181 = scmp.lt.s32.totalorder %s11, 1
        %s182 = scalar_select %p181, %s11, 1
        %s183 = smul.addr %s182, 2
        %s184 = smul.addr %s183, 8
        %s185 = scalar_lea.vmem %s0, %s184
      $region36: #{grounding_dino_head.1} parent=31 // pred_fallthru
        _
    $region32: #{grounding_dino_head.1} parent=5 // pred_fallthru
      _
    %p186 = scmp.le.s32.totalorder 1, %s11
    %p187 = scmp.lt.s32.totalorder %s11, 3
    %p188 = pnand %p186, %p187
    %p189 = pneg %p188
    // Predicated region
    $region37: #{grounding_dino_head.1} parent=5 // pred_check
      _
    $region38: #{grounding_dino_head.1} parent=5 // pred_check_branch
      %191 = sbr.rel (%p188) target = $region40
    $region39: #{grounding_dino_head.1} parent=5 // pred_region
      %s192 = ssub.s32 %s11, 1
      %p193 = scmp.lt.s32.totalorder %s16, 1
      %s194 = scalar_select %p193, %s16, 1
      %s195 = smul.addr %s194, 2
      %s196 = smul.addr %s195, 8
      %s197 = scalar_lea.vmem %s0, %s196
      %p198 = pneg %p37
      %p199 = pneg %p34
      %p200 = pneg %p58
      %p201 = pneg %p55
      %p202 = pneg %p79
      %p203 = pneg %p76
      %p204 = pneg %p100
      %p205 = pneg %p97
      %p206 = pneg %p121
      %p207 = pneg %p118
      %p208 = pneg %p147
      %p209 = pneg %p144
      %p210 = scmp.lt.s32.totalorder %s16, 1
      %s211 = scalar_select %p210, %s16, 1
      %s212 = smul.addr %s211, 8
      %s213 = scalar_lea.vmem %s5, %s212
      %p214 = scmp.lt.s32.totalorder %s16, 1
      %s215 = scalar_select %p214, %s16, 1
      %s216 = smul.addr %s215, 2
      %s217 = smul.addr %s216, 8
      %s218 = scalar_lea.vmem %s0, %s217
      %p219 = scmp.lt.s32.totalorder %s16, 1
      %s220 = scalar_select %p219, %s16, 1
      %s221 = smul.addr %s220, 8
      %s222 = scalar_lea.vmem %s5, %s221
      %v223 = vld [vmem:[%s218] sm:$0xff]
      %v224 = vld [vmem:[%s218 + $0x8] sm:$0xff]
      %v225 = vld [vmem:[%s1] sm:$0xff]
      %v226 = vld [vmem:[%s1 + $0x8] sm:$0xff]
      %v227 = vld [vmem:[%s1 + $0x10] sm:$0xff]
      %v228 = vld [vmem:[%s1 + $0x18] sm:$0xff]
      %v229 = vld [vmem:[%s1 + $0x20] sm:$0xff]
      %v230 = vld [vmem:[%s1 + $0x28] sm:$0xff]
      %v231 = vld [vmem:[%s1 + $0x30] sm:$0xff]
      %v232 = vld [vmem:[%s1 + $0x38] sm:$0xff]
      %vm233 = vcmask 523264
      %v235 = vsel %vm233, %v223, 0
      %v238 = vsel %vm233, %v224, 0
      %240 = vmatpush.msra.mxu0 0.0
      %241 = vmatpush.msra.mxu0 0.0
      %242 = vmatpush.msra.mxu0 0.0
      %243 = vmatpush.msra.mxu0 0.0
      %244 = vmatpush.msra.mxu0 0.0
      %245 = vmatpush.msra.mxu0 0.0
      %246 = vmatpush.msra.mxu0 0.0
      %247 = vmatpush.msra.mxu0 0.0
      %248 = vmatpush.msra.mxu0 %v232
      %249 = vmatpush.msra.mxu0 %v231
      %250 = vmatpush.msra.mxu0 %v230
      %251 = vmatpush.msra.mxu0 %v229
      %252 = vmatpush.msra.mxu0 %v228
      %253 = vmatpush.msra.mxu0 %v227
      %254 = vmatpush.msra.mxu0 %v226
      %255 = vmatpush.msra.mxu0 %v225
      %256 = vmatmul.f32.gmra.mxu0 %v235
      %v257 = vpop.f32.mrf.mxu0
      %v258 = vadd.f32 0.0, %v257
      %259 = vmatmul.f32.gmra.mxu0 %v238
      %v260 = vpop.f32.mrf.mxu0
      %v261 = vadd.f32 0.0, %v260
      %262 = vdwg.mxu0
      %v263 = vld [vmem:[%s2] sm:$0xff]
      %vm264 = vcmask 261120
      %v266 = vsel %vm264, %v263, 0
      %v269 = vsel %vm264, %v258, 0
      %v272 = vsel %vm264, %v261, 0
      %274 = vmatpush.xpose.msra.mxu0 0.0
      %275 = vmatpush.xpose.msra.mxu0 0.0
      %276 = vmatpush.xpose.msra.mxu0 0.0
      %277 = vmatpush.xpose.msra.mxu0 0.0
      %278 = vmatpush.xpose.msra.mxu0 0.0
      %279 = vmatpush.xpose.msra.mxu0 0.0
      %280 = vmatpush.xpose.msra.mxu0 0.0
      %281 = vmatpush.xpose.msra.mxu0 0.0
      %282 = vmatpush.xpose.msra.mxu0 0.0
      %283 = vmatpush.xpose.msra.mxu0 0.0
      %284 = vmatpush.xpose.msra.mxu0 0.0
      %285 = vmatpush.xpose.msra.mxu0 0.0
      %286 = vmatpush.xpose.msra.mxu0 0.0
      %287 = vmatpush.xpose.msra.mxu0 0.0
      %288 = vmatpush.xpose.msra.mxu0 %v272
      %289 = vmatpush.xpose.msra.mxu0 %v269
      %290 = vmatmul.f32.gmra.mxu0 %v266
      %v291 = vpop.f32.mrf.mxu0
      %v292 = vadd.f32 0.0, %v291
      %293 = vdwg.mxu0
      %v294 = vmul.f32 %v292, 0.17677669
      %vm295 = vcmask 130048
      %v296 = vsel %vm295, %v294, -inf
      %297 = vmax.xlane.f32.xlu0 %v296
      %v298 = vpop.xlane.xlu0 %297
      %v299 = vsub.f32 %v294, %v298
      %v300 = vmul.f32 %v299, 1.442695
      %v301 = vpow.pop %v300
      %v302 = vsel %vm295, %v301, 0.0
      %303 = vadd.xlane.f32.xlu0 %v302
      %v304 = vpop.xlane.xlu0 %303
      %v305 = vrcp.pop %v304
      %v306 = vmul.f32 %v304, %v305
      %v307 = vsub.f32 1.0, %v306
      %v308 = vmul.f32 %v305, %v307
      %v309 = vadd.f32 %v305, %v308
      %vm310 = vweird.f32 %v304
      %vm311 = vweird.f32 %v305
      %vm312 = vmor %vm310, %vm311
      %v313 = vsel %vm312, %v305, %v309
      %v314 = vand.u32 2147483647, %v304
      %vm315 = vcmp.eq.f32.partialorder %v314, 8.507059e+37
      %v316 = vand.u32 %v304, 2147483648
      %v317 = vor.u32 1.1754944e-38, %v316
      %v318 = vsel %vm315, %v317, %v313
      %v319 = vmul.f32 %v301, %v318
      %v321 = vsel %vm295, %v319, 0
      %323 = vmatpush.msra.mxu0 0.0
      %324 = vmatpush.msra.mxu0 0.0
      %325 = vmatpush.msra.mxu0 0.0
      %326 = vmatpush.msra.mxu0 0.0
      %327 = vmatpush.msra.mxu0 0.0
      %328 = vmatpush.msra.mxu0 0.0
      %329 = vmatpush.msra.mxu0 0.0
      %330 = vmatpush.msra.mxu0 0.0
      %331 = vmatpush.msra.mxu0 0.0
      %332 = vmatpush.msra.mxu0 0.0
      %333 = vmatpush.msra.mxu0 0.0
      %334 = vmatpush.msra.mxu0 0.0
      %335 = vmatpush.msra.mxu0 0.0
      %336 = vmatpush.msra.mxu0 0.0
      %337 = vmatpush.msra.mxu0 %v261
      %338 = vmatpush.msra.mxu0 %v258
      %339 = vmatmul.f32.gmra.mxu0 %v321
      %v340 = vpop.f32.mrf.mxu0
      %v341 = vadd.f32 0.0, %v340
      %342 = vdwg.mxu0
      %v343 = vld [vmem:[%s3] sm:$0xff]
      %v344 = vld [vmem:[%s3 + $0x8] sm:$0xff]
      %v345 = vld [vmem:[%s3 + $0x10] sm:$0xff]
      %v346 = vld [vmem:[%s3 + $0x18] sm:$0xff]
      %v347 = vld [vmem:[%s4] sm:$0x1]
      %v349 = vperm.slane %v347, 0
      %v352 = vsel %vm264, %v341, 0
      %354 = vmatpush.msra.mxu0 0.0
      %355 = vmatpush.msra.mxu0 0.0
      %356 = vmatpush.msra.mxu0 0.0
      %357 = vmatpush.msra.mxu0 0.0
      %358 = vmatpush.msra.mxu0 0.0
      %359 = vmatpush.msra.mxu0 0.0
      %360 = vmatpush.msra.mxu0 0.0
      %361 = vmatpush.msra.mxu0 0.0
      %362 = vmatpush.msra.mxu0 0.0
      %363 = vmatpush.msra.mxu0 0.0
      %364 = vmatpush.msra.mxu0 0.0
      %365 = vmatpush.msra.mxu0 0.0
      %366 = vmatpush.msra.mxu0 %v346
      %367 = vmatpush.msra.mxu0 %v345
      %368 = vmatpush.msra.mxu0 %v344
      %369 = vmatpush.msra.mxu0 %v343
      %370 = vmatmul.f32.gmra.mxu0 %v352
      %v371 = vpop.f32.mrf.mxu0
      %v372 = vadd.f32 %v349, %v371
      %373 = vdwg.mxu0
      %v374 = vlaneseq
      %v375 = vand.u32 %v374, 127
      %vm376 = vcmp.lt.s32.totalorder %v375, 8
      %vm377 = vcmp.ge.s32.totalorder %v375, 8
      %vm378 = vcmp.lt.s32.totalorder %v375, 12
      %vm379 = vmand %vm377, %vm378
      %v380 = vsel %vm376, %v372, -inf
      %381 = vmax.xlane.f32.xlu0 %v380
      %v382 = vpop.xlane.xlu0 %381
      %v383 = vrot.slane %v382, 4
      %v384 = vmax.f32 %v382, %v383
      %v385 = vrot.slane %v384, 2
      %v386 = vmax.f32 %v384, %v385
      %v387 = vrot.slane %v386, 1
      %v388 = vmax.f32 %v386, %v387
      %v389 = vlaneseq
      %v390 = vshrl.u32 %v389, 7
      %vm391 = vcmp.eq.f32.partialorder %v382, %v388
      %v392 = vsel %vm391, %v390, 8
      %v393 = vrot.slane %v392, 4
      %vm394 = vcmp.lt.s32.totalorder %v392, %v393
      %v395 = vsel %vm394, %v392, %v393
      %v396 = vrot.slane %v395, 2
      %vm397 = vcmp.lt.s32.totalorder %v395, %v396
      %v398 = vsel %vm397, %v395, %v396
      %v399 = vrot.slane %v398, 1
      %vm400 = vcmp.lt.s32.totalorder %v398, %v399
      %v401 = vsel %vm400, %v398, %v399
      %vm402 = vcmp.eq.s32.totalorder %v390, %v401
      %v403 = vsel %vm402, 1, 0
      %v404 = vcvt.s32.f32 %v403
      %v405 = vsub.f32 0.0, %v372
      %v406 = vmul.f32 %v405, 1.442695
      %v407 = vpow.pop %v406
      %v408 = vadd.f32 %v407, 1.0
      %v409 = vrcp.pop %v408
      %v410 = vmul.f32 %v408, %v409
      %v411 = vsub.f32 1.0, %v410
      %v412 = vmul.f32 %v409, %v411
      %v413 = vadd.f32 %v409, %v412
      %vm414 = vweird.f32 %v408
      %vm415 = vweird.f32 %v409
      %vm416 = vmor %vm414, %vm415
      %v417 = vsel %vm416, %v409, %v413
      %v418 = vand.u32 2147483647, %v408
      %vm419 = vcmp.eq.f32.partialorder %v418, 8.507059e+37
      %v420 = vand.u32 %v408, 2147483648
      %v421 = vor.u32 1.1754944e-38, %v420
      %v422 = vsel %vm419, %v421, %v417
      %v423 = vmul.f32 1.0, %v422
      %v424 = vsel %vm379, %v423, 0.0
      %v425 = vmul.f32 %v424, %v404
      %v426 = vrot.slane %v425, 4
      %v427 = vadd.f32 %v425, %v426
      %v428 = vrot.slane %v427, 2
      %v429 = vadd.f32 %v427, %v428
      %v430 = vrot.slane %v429, 1
      %v431 = vadd.f32 %v429, %v430
      %vm432 = vcmp.eq.s32.totalorder %v375, 12
      %v433 = vsel %vm432, %v388, %v431
      %434 = vst [vmem:[%s222] sm:$0xff] %v433
      %p435 = scmp.lt.s32.totalorder %s16, 1
      %s436 = scalar_select %p435, %s16, 1
      %s437 = smul.addr %s436, 8
      %s438 = scalar_lea.vmem %s5, %s437
      // Predicated region
      $region41: #{grounding_dino_head.1} parent=39 // pred_check
        %p439 = pneg %p144
      $region42: #{grounding_dino_head.1} parent=39 // pred_check_branch
        %441 = sbr.rel (%p439) target = $region44
      $region43: #{grounding_dino_head.1} parent=39 // pred_region
        _
      $region44: #{grounding_dino_head.1} parent=39 // pred_fallthru
        _
    $region40: #{grounding_dino_head.1} parent=5 // pred_fallthru
      _
    %p442 = scmp.le.s32.totalorder 2, %s11
    // Predicated region
    $region45: #{grounding_dino_head.1} parent=5 // pred_check
      %p443 = pneg %p442
    $region46: #{grounding_dino_head.1} parent=5 // pred_check_branch
      %445 = sbr.rel (%p443) target = $region48
    $region47: #{grounding_dino_head.1} parent=5 // pred_region
      %s446 = ssub.s32 %s11, 2
      // Predicated region
      $region49: #{grounding_dino_head.1} parent=47 // pred_check
        %p447 = pneg %p150
      $region50: #{grounding_dino_head.1} parent=47 // pred_check_branch
        %449 = sbr.rel (%p447) target = $region52
      $region51: #{grounding_dino_head.1} parent=47 // pred_region
        %p450 = scmp.lt.s32.totalorder %s17, 1
        %s451 = scalar_select %p450, %s17, 1
        %s452 = smul.addr %s451, 8
        %s453 = scalar_lea.vmem %s5, %s452
      $region52: #{grounding_dino_head.1} parent=47 // pred_fallthru
        _
    $region48: #{grounding_dino_head.1} parent=5 // pred_fallthru
      _
  $region6: #{grounding_dino_head.1} parent=0 // loop_footer
    %s15 = sadd.s32 1, %s11
  $region7: #{grounding_dino_head.1} parent=0 // loop_footer_branch
    %10 = sbr.rel target = $region3
  $region8: #{grounding_dino_head.1} parent=0 // loop_exit
    _

</llo_original>
